<compile_context>
chip_gen: v7x
topology: tpu7x:2x2x1
jax: 0.10.0
libtpu: 0.0.40
codegen_flags: <defaults>
</compile_context>

<pallas_src>
import jax
import jax.numpy as jnp
from jax.experimental import pallas as pl
from jax.experimental.pallas import tpu as pltpu


def _round_up(x, m):
    return (x + m - 1) // m * m


# ---------------------------------------------------------------------------
# Kernels
# ---------------------------------------------------------------------------

def _resident_kernel(x_ref, w1_ref, b1_ref, w2_ref, b2_ref, o_ref):
    """Whole MLP for one token tile; W1/W2 stay VMEM-resident across the grid."""
    h = jnp.dot(x_ref[...], w1_ref[...], preferred_element_type=jnp.float32)
    h = h + b1_ref[...].astype(jnp.float32)
    h = h * jax.nn.sigmoid(1.702 * h)  # quick_gelu (CLIP default hidden_act)
    y = jnp.dot(h.astype(w2_ref.dtype), w2_ref[...],
                preferred_element_type=jnp.float32)
    o_ref[...] = (y + b2_ref[...].astype(jnp.float32)).astype(o_ref.dtype)


def _streamed_body(x_ref, w1_ref, b1_ref, w2_ref, b2_ref, o_ref, acc_ref,
                   ti, acc_is_out):
    k = pl.program_id(1)

    @pl.when(k == 0)
    def _():
        acc_ref[...] = jnp.zeros_like(acc_ref)

    # fc1 partial: [tm, H] @ [H, ti] -> f32 on the MXU.
    h = jnp.dot(x_ref[...], w1_ref[...], preferred_element_type=jnp.float32)
    off = pl.multiple_of(k * ti, 128)
    h = h + b1_ref[:, pl.ds(off, ti)].astype(jnp.float32)
    h = h * jax.nn.sigmoid(1.702 * h)  # quick_gelu
    # fc2 partial: [tm, ti] @ [ti, H], accumulated over the I grid axis.
    acc_ref[...] += jnp.dot(h.astype(w2_ref.dtype), w2_ref[...],
                            preferred_element_type=jnp.float32)

    @pl.when(k == pl.num_programs(1) - 1)
    def _():
        if acc_is_out:  # acc_ref is o_ref (f32 output) - just add the bias
            o_ref[...] = o_ref[...] + b2_ref[...].astype(o_ref.dtype)
        else:
            o_ref[...] = (acc_ref[...] +
                          b2_ref[...].astype(jnp.float32)).astype(o_ref.dtype)


def _streamed_kernel_acc_in_out(ti):
    def kernel(x_ref, w1_ref, b1_ref, w2_ref, b2_ref, o_ref):
        _streamed_body(x_ref, w1_ref, b1_ref, w2_ref, b2_ref, o_ref, o_ref,
                       ti, True)
    return kernel


def _streamed_kernel_scratch(ti):
    def kernel(x_ref, w1_ref, b1_ref, w2_ref, b2_ref, o_ref, acc_ref):
        _streamed_body(x_ref, w1_ref, b1_ref, w2_ref, b2_ref, o_ref, acc_ref,
                       ti, False)
    return kernel


# ---------------------------------------------------------------------------
# Tile / budget selection
# ---------------------------------------------------------------------------

def _pick_tm(M, tm_max):
    """Token tile: multiple of 16 (bf16 sublane packing), over-padding <= ~15%,
    preferring >= 2 tiles so the parallel axis shards across v7x's 2 TCs."""
    if M <= 16:
        return 16
    candidates = [c for c in (1024, 512, 256, 128, 64, 32, 16) if c <= tm_max]
    for need_two_tiles in (True, False):
        for tm in candidates:
            Mp = _round_up(M, tm)
            if Mp > 1.15 * M + 15:
                continue
            if need_two_tiles and Mp // tm < 2:
                continue
            return tm
    return 16


def _pick_ti(I, ti_max):
    # Largest lane-dense (multiple of 128) tile of the intermediate dim that
    # divides I; fall back to the full dim (always a legal BlockSpec).
    for ti in (ti_max, 1024, 512, 256, 128):
        if ti <= I and I % ti == 0 and ti % 128 == 0:
            return ti
    return I


def _vmem_cap_bytes():
    """Usable VMEM budget: ~80% of physical (leave compiler-scratch headroom).
    ~51 MiB on v7x (64 MiB/TC), ~102 MiB on v5e/v6e (128 MiB)."""
    cap = 64 << 20  # conservative fallback
    try:
        cap = int(pltpu.get_tpu_info().vmem_capacity_bytes)
    except Exception:
        pass
    return (cap * 4) // 5


# ---------------------------------------------------------------------------
# Wrapper
# ---------------------------------------------------------------------------

def clip_mlp(x, w1, b1, w2, b2, *, tm=None, ti=512,
             compute_dtype=jnp.bfloat16, weights_resident=None):
    """Fused CLIP MLP: quick_gelu(x @ W1 + b1) @ W2 + b2.

    x: [..., H]; w1: [H, I]; b1: [I]; w2: [I, H]; b2: [H].
    """
    orig_shape = x.shape
    H = orig_shape[-1]
    I = w1.shape[1]
    out_dtype = x.dtype

    x2d = x.reshape(-1, H)
    M = x2d.shape[0]

    in_b = jnp.dtype(compute_dtype).itemsize
    out_b = jnp.dtype(out_dtype).itemsize
    vmem_cap = _vmem_cap_bytes()

    # --- token tile --------------------------------------------------------
    user_tm = tm
    if user_tm is not None:
        tm = max(16, min(_round_up(user_tm, 16), _round_up(M, 16)))
    else:
        tm = _pick_tm(M, tm_max=512)

    # --- resident vs streamed weights ---------------------------------------
    def resident_budget(tm_):
        return (2 * tm_ * H * in_b          # x tile (double-buffered)
                + 2 * tm_ * H * out_b       # out tile (double-buffered)
                + 2 * 2 * H * I * in_b      # W1 + W2 (budget both buffers)
                + 2 * (I + H) * 4           # biases (f32)
                + tm_ * I * 4               # live f32 fc1/gelu intermediate
                + tm_ * H * 4)              # live f32 fc2 result

    if weights_resident is None:
        weights_resident = int(resident_budget(tm) * 1.25) <= vmem_cap

    if (not weights_resident) and user_tm is None:
        # Weight-streaming schedule: amortize weight DMA over a bigger token
        # tile (arithmetic intensity ~ tm flops per weight byte).
        tm = _pick_tm(M, tm_max=1024)

    Mp = _round_up(M, tm)
    n_tiles = Mp // tm

    if Mp != M:
        x2d = jnp.pad(x2d, ((0, Mp - M), (0, 0)))

    # MXU operands in the compute dtype; biases / accumulation in f32.
    xc = x2d.astype(compute_dtype)
    w1c = w1.astype(compute_dtype)
    w2c = w2.astype(compute_dtype)
    b1c = b1.reshape(1, I).astype(jnp.float32)
    b2c = b2.reshape(1, H).astype(jnp.float32)

    if weights_resident:
        # Single grid axis over token tiles; weights/biases have constant
        # index_maps -> DMA'd once, then VMEM-resident for the whole call.
        grid = (n_tiles,)
        in_specs = [
            pl.BlockSpec((tm, H), lambda i: (i, 0)),   # x tile
            pl.BlockSpec((H, I), lambda i: (0, 0)),    # W1 (resident)
            pl.BlockSpec((1, I), lambda i: (0, 0)),    # b1 (resident)
            pl.BlockSpec((I, H), lambda i: (0, 0)),    # W2 (resident)
            pl.BlockSpec((1, H), lambda i: (0, 0)),    # b2 (resident)
        ]
        out_specs = pl.BlockSpec((tm, H), lambda i: (i, 0))
        scratch_shapes = []
        kernel = _resident_kernel
        dim_sem = ("parallel",)
        vmem_req = int(resident_budget(tm) * 1.25)
        weight_hbm_bytes = 2 * H * I * in_b            # read exactly once
    else:
        ti = _pick_ti(I, ti)
        acc_is_out = (jnp.dtype(out_dtype) == jnp.dtype(jnp.float32))
        grid = (n_tiles, I // ti)
        in_specs = [
            pl.BlockSpec((tm, H), lambda i, k: (i, 0)),  # x tile
            pl.BlockSpec((H, ti), lambda i, k: (0, k)),  # W1 slice
            pl.BlockSpec((1, I), lambda i, k: (0, 0)),   # b1 (resident, sliced in-kernel)
            pl.BlockSpec((ti, H), lambda i, k: (k, 0)),  # W2 slice
            pl.BlockSpec((1, H), lambda i, k: (0, 0)),   # b2
        ]
        out_specs = pl.BlockSpec((tm, H), lambda i, k: (i, 0))
        if acc_is_out:
            scratch_shapes = []
            kernel = _streamed_kernel_acc_in_out(ti)
        else:
            scratch_shapes = [pltpu.VMEM((tm, H), jnp.float32)]
            kernel = _streamed_kernel_scratch(ti)
        dim_sem = ("parallel", "arbitrary")
        budget = (2 * tm * H * in_b + 2 * tm * H * out_b
                  + 2 * 2 * H * ti * in_b
                  + 2 * (I + H) * 4
                  + (0 if acc_is_out else tm * H * 4)
                  + tm * ti * 4 + tm * H * 4)
        vmem_req = int(budget * 1.25)
        # Weights are re-streamed from HBM once per token tile in this schedule.
        weight_hbm_bytes = n_tiles * 2 * H * I * in_b

    vmem_limit = int(min(max(vmem_req, 32 << 20), vmem_cap))

    cost = pl.CostEstimate(
        flops=4 * Mp * H * I,
        transcendentals=Mp * I,
        bytes_accessed=(Mp * H * in_b + Mp * H * out_b
                        + weight_hbm_bytes + (I + H) * 4))

    out = pl.pallas_call(
        kernel,
        out_shape=jax.ShapeDtypeStruct((Mp, H), out_dtype),
        grid_spec=pltpu.PrefetchScalarGridSpec(
            num_scalar_prefetch=0,
            grid=grid,
            in_specs=in_specs,
            out_specs=out_specs,
            scratch_shapes=scratch_shapes,
        ),
        compiler_params=pltpu.CompilerParams(
            dimension_semantics=dim_sem,
            vmem_limit_bytes=vmem_limit),
        cost_estimate=cost,
    )(xc, w1c, b1c, w2c, b2c)

    if Mp != M:
        out = out[:M]
    return out.reshape(orig_shape)


def clip_mlp_reference(x, w1, b1, w2, b2):
    h = x @ w1 + b1
    h = h * jax.nn.sigmoid(1.702 * h)
    return h @ w2 + b2


if __name__ == "__main__":
    # Small CLIPVisionConfig-like sizes (lane-dense: H, I multiples of 128):
    # hidden_size=128, intermediate_size=512, batch=2, seq=8 -> M = 16 tokens.
    batch, seq = 2, 8
    hidden_size, intermediate_size = 128, 512

    key = jax.random.PRNGKey(0)
    k_x, k_w1, k_b1, k_w2, k_b2 = jax.random.split(key, 5)

    x = jax.random.normal(k_x, (batch, seq, hidden_size), dtype=jnp.float32)
    w1 = jax.random.normal(k_w1, (hidden_size, intermediate_size),
                           dtype=jnp.float32) * 0.02
    b1 = jax.random.normal(k_b1, (intermediate_size,), dtype=jnp.float32) * 0.02
    w2 = jax.random.normal(k_w2, (intermediate_size, hidden_size),
                           dtype=jnp.float32) * 0.02
    b2 = jax.random.normal(k_b2, (hidden_size,), dtype=jnp.float32) * 0.02

    ref = clip_mlp_reference(x, w1, b1, w2, b2)

    # 1) Default: weight-resident single-pass schedule (auto-selected).
    out = jax.block_until_ready(clip_mlp(x, w1, b1, w2, b2))
    assert out.shape == (batch, seq, hidden_size)
    assert jnp.allclose(out, ref, atol=2e-2, rtol=2e-2), "resident path mismatch"

    # 2) Streamed (I-reduction) fallback, f32 output accumulated in-place.
    out_s = jax.block_until_ready(
        clip_mlp(x, w1, b1, w2, b2, weights_resident=False, ti=256))
    assert jnp.allclose(out_s, ref, atol=2e-2, rtol=2e-2), "streamed path mismatch"

    # 3) Streamed fallback with bf16 activations/output (f32 scratch accumulator).
    out_b = jax.block_until_ready(
        clip_mlp(x.astype(jnp.bfloat16), w1, b1, w2, b2,
                 weights_resident=False, ti=256))
    assert jnp.allclose(out_b.astype(jnp.float32), ref, atol=8e-2, rtol=8e-2), \
        "streamed bf16 path mismatch"

    print("KERNEL_OK")
</pallas_src>

<mosaic_0001>
module attributes {stable_mosaic.version = 11 : i64} {
  func.func @_resident_kernel(%arg0: i32, %arg1: memref<16x128xbf16, #tpu.memory_space<vmem>>, %arg2: memref<128x512xbf16, #tpu.memory_space<vmem>>, %arg3: memref<1x512xf32, #tpu.memory_space<vmem>>, %arg4: memref<512x128xbf16, #tpu.memory_space<vmem>>, %arg5: memref<1x128xf32, #tpu.memory_space<vmem>>, %arg6: memref<16x128xf32, #tpu.memory_space<vmem>>) attributes {dimension_semantics = [#tpu.dimension_semantics<parallel>], iteration_bounds = array<i64: 1>, scalar_prefetch = 0 : i64, scratch_operands = 0 : i64, tpu.core_type = #tpu.core_type<tc>, window_params = [{transform_indices = @transform_0, window_bounds = array<i64: 16, 128>}, {pipeline_mode = #tpu.pipeline_mode<synchronous>, transform_indices = @transform_1, window_bounds = array<i64: 128, 512>}, {pipeline_mode = #tpu.pipeline_mode<synchronous>, transform_indices = @transform_2, window_bounds = array<i64: 1, 512>}, {pipeline_mode = #tpu.pipeline_mode<synchronous>, transform_indices = @transform_3, window_bounds = array<i64: 512, 128>}, {pipeline_mode = #tpu.pipeline_mode<synchronous>, transform_indices = @transform_4, window_bounds = array<i64: 1, 128>}, {transform_indices = @transform_5, window_bounds = array<i64: 16, 128>}]} {
    %c0 = arith.constant 0 : index
    %c0_0 = arith.constant 0 : index
    %0 = vector.load %arg1[%c0, %c0_0] : memref<16x128xbf16, #tpu.memory_space<vmem>>, vector<16x128xbf16>
    %c0_1 = arith.constant 0 : index
    %c0_2 = arith.constant 0 : index
    %1 = vector.load %arg2[%c0_1, %c0_2] : memref<128x512xbf16, #tpu.memory_space<vmem>>, vector<128x512xbf16>
    %cst = arith.constant dense<0.000000e+00> : vector<16x512xf32>
    %2 = tpu.matmul %0, %1, %cst {dimension_numbers = #tpu.dot_dimension_numbers<[1], [0], [0], [1], [0, 0, 1, 1], [], []>} : vector<16x128xbf16>, vector<128x512xbf16>, vector<16x512xf32> -> vector<16x512xf32>
    %c0_3 = arith.constant 0 : index
    %c0_4 = arith.constant 0 : index
    %3 = vector.load %arg3[%c0_3, %c0_4] : memref<1x512xf32, #tpu.memory_space<vmem>>, vector<1x512xf32>
    %4 = vector.broadcast %3 : vector<1x512xf32> to vector<16x512xf32>
    %5 = arith.addf %2, %4 : vector<16x512xf32>
    %cst_5 = arith.constant 1.702000e+00 : f32
    %6 = vector.broadcast %cst_5 : f32 to vector<16x512xf32>
    %7 = arith.mulf %6, %5 : vector<16x512xf32>
    %8 = arith.negf %7 : vector<16x512xf32>
    %9 = math.exp %8 : vector<16x512xf32>
    %cst_6 = arith.constant 1.000000e+00 : f32
    %10 = vector.broadcast %cst_6 : f32 to vector<16x512xf32>
    %11 = arith.addf %10, %9 : vector<16x512xf32>
    %12 = arith.divf %10, %11 : vector<16x512xf32>
    %13 = arith.mulf %5, %12 : vector<16x512xf32>
    %14 = arith.truncf %13 : vector<16x512xf32> to vector<16x512xbf16>
    %c0_7 = arith.constant 0 : index
    %c0_8 = arith.constant 0 : index
    %15 = vector.load %arg4[%c0_7, %c0_8] : memref<512x128xbf16, #tpu.memory_space<vmem>>, vector<512x128xbf16>
    %cst_9 = arith.constant dense<0.000000e+00> : vector<16x128xf32>
    %16 = tpu.matmul %14, %15, %cst_9 {dimension_numbers = #tpu.dot_dimension_numbers<[1], [0], [0], [1], [0, 0, 1, 1], [], []>} : vector<16x512xbf16>, vector<512x128xbf16>, vector<16x128xf32> -> vector<16x128xf32>
    %c0_10 = arith.constant 0 : index
    %c0_11 = arith.constant 0 : index
    %17 = vector.load %arg5[%c0_10, %c0_11] : memref<1x128xf32, #tpu.memory_space<vmem>>, vector<1x128xf32>
    %18 = vector.broadcast %17 : vector<1x128xf32> to vector<16x128xf32>
    %19 = arith.addf %16, %18 : vector<16x128xf32>
    %c0_12 = arith.constant 0 : index
    %c0_13 = arith.constant 0 : index
    %20 = vector.load %arg6[%c0_12, %c0_13] : memref<16x128xf32, #tpu.memory_space<vmem>>, vector<16x128xf32>
    tpu.vector_store %arg6[%c0_12, %c0_13], %19 {strides = array<i32>} : memref<16x128xf32, #tpu.memory_space<vmem>>, vector<16x128xf32>,
    return
  }
  func.func @transform_0(%arg0: i32) -> (i32, i32) {
    %c0_i32 = arith.constant 0 : i32
    %c0_i32_0 = arith.constant 0 : i32
    return %arg0, %c0_i32 : i32, i32
  }
  func.func @transform_1(%arg0: i32) -> (i32, i32) {
    %c0_i32 = arith.constant 0 : i32
    %c0_i32_0 = arith.constant 0 : i32
    %c0_i32_1 = arith.constant 0 : i32
    return %c0_i32, %c0_i32_0 : i32, i32
  }
  func.func @transform_2(%arg0: i32) -> (i32, i32) {
    %c0_i32 = arith.constant 0 : i32
    %c0_i32_0 = arith.constant 0 : i32
    %c0_i32_1 = arith.constant 0 : i32
    return %c0_i32, %c0_i32_0 : i32, i32
  }
  func.func @transform_3(%arg0: i32) -> (i32, i32) {
    %c0_i32 = arith.constant 0 : i32
    %c0_i32_0 = arith.constant 0 : i32
    %c0_i32_1 = arith.constant 0 : i32
    return %c0_i32, %c0_i32_0 : i32, i32
  }
  func.func @transform_4(%arg0: i32) -> (i32, i32) {
    %c0_i32 = arith.constant 0 : i32
    %c0_i32_0 = arith.constant 0 : i32
    %c0_i32_1 = arith.constant 0 : i32
    return %c0_i32, %c0_i32_0 : i32, i32
  }
  func.func @transform_5(%arg0: i32) -> (i32, i32) {
    %c0_i32 = arith.constant 0 : i32
    %c0_i32_0 = arith.constant 0 : i32
    return %arg0, %c0_i32 : i32, i32
  }
}

</mosaic_0001>

<llo_original>
// kernel: tpu_custom_call.1
$region0: #{tpu_custom_call.1}
  #allocation0 [shape = 'u32[]', space=smem, size = 0x4, offset = 0x4, fixed_abs, tag = 'smem constant byte address 0x4 - core index']
  #allocation1 [shape = 'u32[144,128]{1,0:T(1,128)}', space=vmem, size = 0x12000, scoped, tag = 'internal scratch']
  %s0 = inlined_call_operand.hbm [shape: bf16[16,128], index: 0, kind: input, shape index: {}]
  %s1 = inlined_call_operand.hbm [shape: bf16[128,512], index: 1, kind: input, shape index: {}]
  %s2 = inlined_call_operand.vmem [shape: f32[1,512], index: 2, kind: input, shape index: {}]
  %s3 = inlined_call_operand.hbm [shape: bf16[512,128], index: 3, kind: input, shape index: {}]
  %s4 = inlined_call_operand.vmem [shape: f32[1,128], index: 4, kind: input, shape index: {}]
  %s5 = inlined_call_operand.hbm [shape: f32[16,128], index: 5, kind: output, shape index: {}]
  %s6 = sld [smem:[#allocation0]]
  $region42: #{tpu_custom_call.1} parent=0
    _
  %s8 = ssub.s32 1, %s6
  %s9 = scalar_select 0, %s8, %s6
  $region1: #{tpu_custom_call.1} parent=0
    #allocation2 [shape = 'u8[4096]{0}', space=vmem, size = 0x1000, scoped, tag = 'input window, operand 0, single buffered']
    #allocation3 [shape = 's32[1]{0}', space=sflag, size = 0x4, scoped, tag = 'scoped memory for tpu_custom_call.1']
    #allocation4 [shape = 's32[1]{0}', space=sflag, size = 0x4, scoped, tag = 'scoped memory for tpu_custom_call.1']
    #allocation5 [shape = 'u8[131072]{0}', space=vmem, size = 0x20000, scoped, tag = 'input window, operand 1, single buffered']
    #allocation6 [shape = 's32[1]{0}', space=sflag, size = 0x4, scoped, tag = 'scoped memory for tpu_custom_call.1']
    #allocation7 [shape = 'u8[131072]{0}', space=vmem, size = 0x20000, scoped, tag = 'input window, operand 3, single buffered']
    #allocation8 [shape = 'u8[8192]{0}', space=vmem, size = 0x2000, scoped, tag = 'output window, operand 0, single buffered']
    %10 = vsyncpa [#allocation3], 0
    %11 = vsyncpa [#allocation6], 0
    %12 = vsyncpa [#allocation4], 0
    // Predicated region
    $region2: #{tpu_custom_call.1} parent=1 // pred_check
      _
    $region3: #{tpu_custom_call.1} parent=1 // pred_check_branch
      %14 = sbr.rel (0) target = $region5
    $region4: #{tpu_custom_call.1} parent=1 // pred_region
      %s16 = ssub.s32 128, 128
      %17 = vsyncadd [#allocation3], %s16
      %s18 = sshll.u32 [#allocation2], 4
      %s19 = int_to_ptr.vmem [resolvable:$true] %s18
      %24 = dma.hbm_to_vmem [thread:$0]  %s0, 128, %s19, [#allocation3], 64, 64, 4
    $region5: #{tpu_custom_call.1} parent=1 // pred_fallthru
      _
    // Predicated region
    $region6: #{tpu_custom_call.1} parent=1 // pred_check
      _
    $region7: #{tpu_custom_call.1} parent=1 // pred_check_branch
      %26 = sbr.rel (0) target = $region9
    $region8: #{tpu_custom_call.1} parent=1 // pred_region
      %s28 = ssub.s32 4096, 4096
      %29 = vsyncadd [#allocation6], %s28
      %s30 = sshll.u32 [#allocation5], 4
      %s31 = int_to_ptr.vmem [resolvable:$true] %s30
      %36 = dma.hbm_to_vmem [thread:$0]  %s1, 4096, %s31, [#allocation6], 256, 256, 16
    $region9: #{tpu_custom_call.1} parent=1 // pred_fallthru
      _
    // Predicated region
    $region10: #{tpu_custom_call.1} parent=1 // pred_check
      _
    $region11: #{tpu_custom_call.1} parent=1 // pred_check_branch
      %38 = sbr.rel (0) target = $region13
    $region12: #{tpu_custom_call.1} parent=1 // pred_region
      _
    $region13: #{tpu_custom_call.1} parent=1 // pred_fallthru
      _
    // Predicated region
    $region14: #{tpu_custom_call.1} parent=1 // pred_check
      _
    $region15: #{tpu_custom_call.1} parent=1 // pred_check_branch
      %40 = sbr.rel (0) target = $region17
    $region16: #{tpu_custom_call.1} parent=1 // pred_region
      %s42 = ssub.s32 4096, 4096
      %43 = vsyncadd [#allocation6], %s42
      %s44 = sshll.u32 [#allocation7], 4
      %s45 = int_to_ptr.vmem [resolvable:$true] %s44
      %50 = dma.hbm_to_vmem [thread:$0]  %s3, 4096, %s45, [#allocation6], 64, 64, 4
    $region17: #{tpu_custom_call.1} parent=1 // pred_fallthru
      _
    // Predicated region
    $region18: #{tpu_custom_call.1} parent=1 // pred_check
      _
    $region19: #{tpu_custom_call.1} parent=1 // pred_check_branch
      %52 = sbr.rel (0) target = $region21
    $region20: #{tpu_custom_call.1} parent=1 // pred_region
      _
    $region21: #{tpu_custom_call.1} parent=1 // pred_fallthru
      _
    // Predicated region
    $region22: #{tpu_custom_call.1} parent=1 // pred_check
      _
    $region23: #{tpu_custom_call.1} parent=1 // pred_check_branch
      %54 = sbr.rel (0) target = $region25
    $region24: #{tpu_custom_call.1} parent=1 // pred_region
      %55 = dma.done [#allocation3], 128
    $region25: #{tpu_custom_call.1} parent=1 // pred_fallthru
      _
    // Predicated region
    $region26: #{tpu_custom_call.1} parent=1 // pred_check
      _
    $region27: #{tpu_custom_call.1} parent=1 // pred_check_branch
      %57 = sbr.rel (0) target = $region29
    $region28: #{tpu_custom_call.1} parent=1 // pred_region
      %58 = dma.done [#allocation6], 4096
    $region29: #{tpu_custom_call.1} parent=1 // pred_fallthru
      _
    // Predicated region
    $region30: #{tpu_custom_call.1} parent=1 // pred_check
      _
    $region31: #{tpu_custom_call.1} parent=1 // pred_check_branch
      %60 = sbr.rel (0) target = $region33
    $region32: #{tpu_custom_call.1} parent=1 // pred_region
      %61 = dma.done [#allocation6], 4096
    $region33: #{tpu_custom_call.1} parent=1 // pred_fallthru
      _
    %v63 = vld [vmem:[#allocation2] sm:$0xf]
    %v64 = vld [vmem:[#allocation2 + $0x4] sm:$0xf]
    %v65 = vld [vmem:[#allocation5] sm:$0xff]
    %v66 = vld [vmem:[#allocation5 + $0x8] sm:$0xff]
    %v67 = vld [vmem:[#allocation5 + $0x10] sm:$0xff]
    %v68 = vld [vmem:[#allocation5 + $0x18] sm:$0xff]
    %v69 = vld [vmem:[#allocation5 + $0x20] sm:$0xff]
    %v70 = vld [vmem:[#allocation5 + $0x28] sm:$0xff]
    %v71 = vld [vmem:[#allocation5 + $0x30] sm:$0xff]
    %v72 = vld [vmem:[#allocation5 + $0x38] sm:$0xff]
    %v73 = vld [vmem:[#allocation5 + $0x40] sm:$0xff]
    %v74 = vld [vmem:[#allocation5 + $0x48] sm:$0xff]
    %v75 = vld [vmem:[#allocation5 + $0x50] sm:$0xff]
    %v76 = vld [vmem:[#allocation5 + $0x58] sm:$0xff]
    %v77 = vld [vmem:[#allocation5 + $0x60] sm:$0xff]
    %v78 = vld [vmem:[#allocation5 + $0x68] sm:$0xff]
    %v79 = vld [vmem:[#allocation5 + $0x70] sm:$0xff]
    %v80 = vld [vmem:[#allocation5 + $0x78] sm:$0xff]
    %v81 = vld [vmem:[#allocation5 + $0x80] sm:$0xff]
    %v82 = vld [vmem:[#allocation5 + $0x88] sm:$0xff]
    %v83 = vld [vmem:[#allocation5 + $0x90] sm:$0xff]
    %v84 = vld [vmem:[#allocation5 + $0x98] sm:$0xff]
    %v85 = vld [vmem:[#allocation5 + $0xa0] sm:$0xff]
    %v86 = vld [vmem:[#allocation5 + $0xa8] sm:$0xff]
    %v87 = vld [vmem:[#allocation5 + $0xb0] sm:$0xff]
    %v88 = vld [vmem:[#allocation5 + $0xb8] sm:$0xff]
    %v89 = vld [vmem:[#allocation5 + $0xc0] sm:$0xff]
    %v90 = vld [vmem:[#allocation5 + $0xc8] sm:$0xff]
    %v91 = vld [vmem:[#allocation5 + $0xd0] sm:$0xff]
    %v92 = vld [vmem:[#allocation5 + $0xd8] sm:$0xff]
    %v93 = vld [vmem:[#allocation5 + $0xe0] sm:$0xff]
    %v94 = vld [vmem:[#allocation5 + $0xe8] sm:$0xff]
    %v95 = vld [vmem:[#allocation5 + $0xf0] sm:$0xff]
    %v96 = vld [vmem:[#allocation5 + $0xf8] sm:$0xff]
    %v97 = vld [vmem:[%s2] sm:$0xf]
    %v99 = vlaneseq
    %v100 = vshrl.u32 %v99, 7
    %v101 = vsub.s32 0, %v100
    %v102 = vrot.slane %v97, %v101
    %v103 = vlaneseq
    %v104 = vshrl.u32 %v103, 7
    %v105 = vsub.s32 1, %v104
    %v106 = vrot.slane %v97, %v105
    %v107 = vlaneseq
    %v108 = vshrl.u32 %v107, 7
    %v109 = vsub.s32 2, %v108
    %v110 = vrot.slane %v97, %v109
    %v111 = vlaneseq
    %v112 = vshrl.u32 %v111, 7
    %v113 = vsub.s32 3, %v112
    %v114 = vrot.slane %v97, %v113
    %v121 = vunpack.c.l.b16 %v63
    %v122 = vunpack.c.l.b16 %v64
    %v123 = vpack.c.b16 %v122, %v121
    %v157 = vunpack.c.l.b16 %v65
    %v158 = vunpack.c.h.b16 %v65
    %v159 = vunpack.c.l.b16 %v66
    %v160 = vunpack.c.h.b16 %v66
    %v161 = vunpack.c.l.b16 %v67
    %v162 = vunpack.c.h.b16 %v67
    %v163 = vunpack.c.l.b16 %v68
    %v164 = vunpack.c.h.b16 %v68
    %v165 = vunpack.c.l.b16 %v69
    %v166 = vunpack.c.h.b16 %v69
    %v167 = vunpack.c.l.b16 %v70
    %v168 = vunpack.c.h.b16 %v70
    %v169 = vunpack.c.l.b16 %v71
    %v170 = vunpack.c.h.b16 %v71
    %v171 = vunpack.c.l.b16 %v72
    %v172 = vunpack.c.h.b16 %v72
    %v173 = vunpack.c.l.b16 %v73
    %v174 = vunpack.c.h.b16 %v73
    %v175 = vunpack.c.l.b16 %v74
    %v176 = vunpack.c.h.b16 %v74
    %v177 = vunpack.c.l.b16 %v75
    %v178 = vunpack.c.h.b16 %v75
    %v179 = vunpack.c.l.b16 %v76
    %v180 = vunpack.c.h.b16 %v76
    %v181 = vunpack.c.l.b16 %v77
    %v182 = vunpack.c.h.b16 %v77
    %v183 = vunpack.c.l.b16 %v78
    %v184 = vunpack.c.h.b16 %v78
    %v185 = vunpack.c.l.b16 %v79
    %v186 = vunpack.c.h.b16 %v79
    %v187 = vunpack.c.l.b16 %v80
    %v188 = vunpack.c.h.b16 %v80
    %v189 = vunpack.c.l.b16 %v81
    %v190 = vunpack.c.h.b16 %v81
    %v191 = vunpack.c.l.b16 %v82
    %v192 = vunpack.c.h.b16 %v82
    %v193 = vunpack.c.l.b16 %v83
    %v194 = vunpack.c.h.b16 %v83
    %v195 = vunpack.c.l.b16 %v84
    %v196 = vunpack.c.h.b16 %v84
    %v197 = vunpack.c.l.b16 %v85
    %v198 = vunpack.c.h.b16 %v85
    %v199 = vunpack.c.l.b16 %v86
    %v200 = vunpack.c.h.b16 %v86
    %v201 = vunpack.c.l.b16 %v87
    %v202 = vunpack.c.h.b16 %v87
    %v203 = vunpack.c.l.b16 %v88
    %v204 = vunpack.c.h.b16 %v88
    %v205 = vunpack.c.l.b16 %v89
    %v206 = vunpack.c.h.b16 %v89
    %v207 = vunpack.c.l.b16 %v90
    %v208 = vunpack.c.h.b16 %v90
    %v209 = vunpack.c.l.b16 %v91
    %v210 = vunpack.c.h.b16 %v91
    %v211 = vunpack.c.l.b16 %v92
    %v212 = vunpack.c.h.b16 %v92
    %v213 = vunpack.c.l.b16 %v93
    %v214 = vunpack.c.h.b16 %v93
    %v215 = vunpack.c.l.b16 %v94
    %v216 = vunpack.c.h.b16 %v94
    %v217 = vunpack.c.l.b16 %v95
    %v218 = vunpack.c.h.b16 %v95
    %v219 = vunpack.c.l.b16 %v96
    %v220 = vunpack.c.h.b16 %v96
    %v221 = vpack.c.b16 %v161, %v157
    %v222 = vpack.c.b16 %v162, %v158
    %v223 = vpack.c.b16 %v163, %v159
    %v224 = vpack.c.b16 %v164, %v160
    %v225 = vpack.c.b16 %v169, %v165
    %v226 = vpack.c.b16 %v170, %v166
    %v227 = vpack.c.b16 %v171, %v167
    %v228 = vpack.c.b16 %v172, %v168
    %v229 = vpack.c.b16 %v177, %v173
    %v230 = vpack.c.b16 %v178, %v174
    %v231 = vpack.c.b16 %v179, %v175
    %v232 = vpack.c.b16 %v180, %v176
    %v233 = vpack.c.b16 %v185, %v181
    %v234 = vpack.c.b16 %v186, %v182
    %v235 = vpack.c.b16 %v187, %v183
    %v236 = vpack.c.b16 %v188, %v184
    %v237 = vpack.c.b16 %v193, %v189
    %v238 = vpack.c.b16 %v194, %v190
    %v239 = vpack.c.b16 %v195, %v191
    %v240 = vpack.c.b16 %v196, %v192
    %v241 = vpack.c.b16 %v201, %v197
    %v242 = vpack.c.b16 %v202, %v198
    %v243 = vpack.c.b16 %v203, %v199
    %v244 = vpack.c.b16 %v204, %v200
    %v245 = vpack.c.b16 %v209, %v205
    %v246 = vpack.c.b16 %v210, %v206
    %v247 = vpack.c.b16 %v211, %v207
    %v248 = vpack.c.b16 %v212, %v208
    %v249 = vpack.c.b16 %v217, %v213
    %v250 = vpack.c.b16 %v218, %v214
    %v251 = vpack.c.b16 %v219, %v215
    %v252 = vpack.c.b16 %v220, %v216
    %285 = vmatprep.subr.bf16.mxu0 %v222
    %286 = vmatpush1.bf16.msra.mxu0 %v221
    %287 = vmatprep.subr.bf16.mxu0 %v226
    %288 = vmatpush1.bf16.msra.mxu0 %v225
    %289 = vmatprep.subr.bf16.mxu0 %v230
    %290 = vmatpush1.bf16.msra.mxu0 %v229
    %291 = vmatprep.subr.bf16.mxu0 %v234
    %292 = vmatpush1.bf16.msra.mxu0 %v233
    %293 = vmatprep.subr.bf16.mxu0 %v238
    %294 = vmatpush1.bf16.msra.mxu0 %v237
    %295 = vmatprep.subr.bf16.mxu0 %v242
    %296 = vmatpush1.bf16.msra.mxu0 %v241
    %297 = vmatprep.subr.bf16.mxu0 %v246
    %298 = vmatpush1.bf16.msra.mxu0 %v245
    %299 = vmatprep.subr.bf16.mxu0 %v250
    %300 = vmatpush1.bf16.msra.mxu0 %v249
    %301 = vmatprep.subr.bf16.mxu0 0
    %302 = vmatpush1.bf16.msra.mxu0 0
    %303 = vmatprep.subr.bf16.mxu0 0
    %304 = vmatpush1.bf16.msra.mxu0 0
    %305 = vmatprep.subr.bf16.mxu0 0
    %306 = vmatpush1.bf16.msra.mxu0 0
    %307 = vmatprep.subr.bf16.mxu0 0
    %308 = vmatpush1.bf16.msra.mxu0 0
    %309 = vmatprep.subr.bf16.mxu0 0
    %310 = vmatpush1.bf16.msra.mxu0 0
    %311 = vmatprep.subr.bf16.mxu0 0
    %312 = vmatpush1.bf16.msra.mxu0 0
    %313 = vmatprep.subr.bf16.mxu0 0
    %314 = vmatpush1.bf16.msra.mxu0 0
    %315 = vmatprep.subr.bf16.mxu0 0
    %316 = vmatpush1.bf16.msra.mxu0 0
    %317 = vmatprep.mubr.bf16.mxu0 0
    %318 = vmatmul.mubr.bf16.gmra.mrb[0].mxu0 %v123
    %v319 = vpop.f32.mrb[0].mxu0
    %v320 = vadd.f32 %v102, %v319
    %v321 = vpop.f32.mrb[0].mxu0
    %v322 = vadd.f32 %v106, %v321
    %v323 = vpop.f32.mrb[0].mxu0
    %v324 = vadd.f32 %v102, %v323
    %v325 = vpop.f32.mrb[0].mxu0
    %v326 = vadd.f32 %v106, %v325
    %327 = vdwg.mxu0
    %328 = vmatprep.subr.bf16.mxu0 %v224
    %329 = vmatpush1.bf16.msra.mxu0 %v223
    %330 = vmatprep.subr.bf16.mxu0 %v228
    %331 = vmatpush1.bf16.msra.mxu0 %v227
    %332 = vmatprep.subr.bf16.mxu0 %v232
    %333 = vmatpush1.bf16.msra.mxu0 %v231
    %334 = vmatprep.subr.bf16.mxu0 %v236
    %335 = vmatpush1.bf16.msra.mxu0 %v235
    %336 = vmatprep.subr.bf16.mxu0 %v240
    %337 = vmatpush1.bf16.msra.mxu0 %v239
    %338 = vmatprep.subr.bf16.mxu0 %v244
    %339 = vmatpush1.bf16.msra.mxu0 %v243
    %340 = vmatprep.subr.bf16.mxu0 %v248
    %341 = vmatpush1.bf16.msra.mxu0 %v247
    %342 = vmatprep.subr.bf16.mxu0 %v252
    %343 = vmatpush1.bf16.msra.mxu0 %v251
    %344 = vmatprep.subr.bf16.mxu0 0
    %345 = vmatpush1.bf16.msra.mxu0 0
    %346 = vmatprep.subr.bf16.mxu0 0
    %347 = vmatpush1.bf16.msra.mxu0 0
    %348 = vmatprep.subr.bf16.mxu0 0
    %349 = vmatpush1.bf16.msra.mxu0 0
    %350 = vmatprep.subr.bf16.mxu0 0
    %351 = vmatpush1.bf16.msra.mxu0 0
    %352 = vmatprep.subr.bf16.mxu0 0
    %353 = vmatpush1.bf16.msra.mxu0 0
    %354 = vmatprep.subr.bf16.mxu0 0
    %355 = vmatpush1.bf16.msra.mxu0 0
    %356 = vmatprep.subr.bf16.mxu0 0
    %357 = vmatpush1.bf16.msra.mxu0 0
    %358 = vmatprep.subr.bf16.mxu0 0
    %359 = vmatpush1.bf16.msra.mxu0 0
    %360 = vmatprep.mubr.bf16.mxu0 0
    %361 = vmatmul.mubr.bf16.gmra.mrb[0].mxu0 %v123
    %v362 = vpop.f32.mrb[0].mxu0
    %v363 = vadd.f32 %v110, %v362
    %v364 = vpop.f32.mrb[0].mxu0
    %v365 = vadd.f32 %v114, %v364
    %v366 = vpop.f32.mrb[0].mxu0
    %v367 = vadd.f32 %v110, %v366
    %v368 = vpop.f32.mrb[0].mxu0
    %v369 = vadd.f32 %v114, %v368
    %370 = vdwg.mxu0
    %v371 = vmul.f32 %v320, 1.702
    %v372 = vmul.f32 %v322, 1.702
    %v373 = vmul.f32 %v363, 1.702
    %v374 = vmul.f32 %v365, 1.702
    %v375 = vmul.f32 %v324, 1.702
    %v376 = vmul.f32 %v326, 1.702
    %v377 = vmul.f32 %v367, 1.702
    %v378 = vmul.f32 %v369, 1.702
    %v379 = vxor.u32 %v371, 2147483648
    %v380 = vxor.u32 %v372, 2147483648
    %v381 = vxor.u32 %v373, 2147483648
    %v382 = vxor.u32 %v374, 2147483648
    %v383 = vxor.u32 %v375, 2147483648
    %v384 = vxor.u32 %v376, 2147483648
    %v385 = vxor.u32 %v377, 2147483648
    %v386 = vxor.u32 %v378, 2147483648
    %v387 = vmul.f32 %v379, 1.442695
    %v388 = vpow.pop %v387
    %v389 = vmul.f32 %v380, 1.442695
    %v390 = vpow.pop %v389
    %v391 = vmul.f32 %v381, 1.442695
    %v392 = vpow.pop %v391
    %v393 = vmul.f32 %v382, 1.442695
    %v394 = vpow.pop %v393
    %v395 = vmul.f32 %v383, 1.442695
    %v396 = vpow.pop %v395
    %v397 = vmul.f32 %v384, 1.442695
    %v398 = vpow.pop %v397
    %v399 = vmul.f32 %v385, 1.442695
    %v400 = vpow.pop %v399
    %v401 = vmul.f32 %v386, 1.442695
    %v402 = vpow.pop %v401
    %v403 = vadd.f32 %v388, 1.0
    %v404 = vadd.f32 %v390, 1.0
    %v405 = vadd.f32 %v392, 1.0
    %v406 = vadd.f32 %v394, 1.0
    %v407 = vadd.f32 %v396, 1.0
    %v408 = vadd.f32 %v398, 1.0
    %v409 = vadd.f32 %v400, 1.0
    %v410 = vadd.f32 %v402, 1.0
    %v411 = vrcp.pop %v403
    %v412 = vmul.f32 1.0, %v411
    %v413 = vrcp.pop %v404
    %v414 = vmul.f32 1.0, %v413
    %v415 = vrcp.pop %v405
    %v416 = vmul.f32 1.0, %v415
    %v417 = vrcp.pop %v406
    %v418 = vmul.f32 1.0, %v417
    %v419 = vrcp.pop %v407
    %v420 = vmul.f32 1.0, %v419
    %v421 = vrcp.pop %v408
    %v422 = vmul.f32 1.0, %v421
    %v423 = vrcp.pop %v409
    %v424 = vmul.f32 1.0, %v423
    %v425 = vrcp.pop %v410
    %v426 = vmul.f32 1.0, %v425
    %v427 = vmul.f32 %v320, %v412
    %v428 = vmul.f32 %v322, %v414
    %v429 = vmul.f32 %v363, %v416
    %v430 = vmul.f32 %v365, %v418
    %v431 = vmul.f32 %v324, %v420
    %v432 = vmul.f32 %v326, %v422
    %v433 = vmul.f32 %v367, %v424
    %v434 = vmul.f32 %v369, %v426
    %v435 = vpack.c.bf16 %v431, %v427
    %v436 = vpack.c.bf16 %v432, %v428
    %v437 = vpack.c.bf16 %v433, %v429
    %v438 = vpack.c.bf16 %v434, %v430
    %v439 = vld [vmem:[#allocation7] sm:$0xf]
    %v440 = vld [vmem:[#allocation7 + $0x4] sm:$0xf]
    %v441 = vld [vmem:[#allocation7 + $0x8] sm:$0xf]
    %v442 = vld [vmem:[#allocation7 + $0xc] sm:$0xf]
    %v443 = vld [vmem:[#allocation7 + $0x10] sm:$0xf]
    %v444 = vld [vmem:[#allocation7 + $0x14] sm:$0xf]
    %v445 = vld [vmem:[#allocation7 + $0x18] sm:$0xf]
    %v446 = vld [vmem:[#allocation7 + $0x1c] sm:$0xf]
    %v447 = vld [vmem:[#allocation7 + $0x20] sm:$0xf]
    %v448 = vld [vmem:[#allocation7 + $0x24] sm:$0xf]
    %v449 = vld [vmem:[#allocation7 + $0x28] sm:$0xf]
    %v450 = vld [vmem:[#allocation7 + $0x2c] sm:$0xf]
    %v451 = vld [vmem:[#allocation7 + $0x30] sm:$0xf]
    %v452 = vld [vmem:[#allocation7 + $0x34] sm:$0xf]
    %v453 = vld [vmem:[#allocation7 + $0x38] sm:$0xf]
    %v454 = vld [vmem:[#allocation7 + $0x3c] sm:$0xf]
    %v455 = vld [vmem:[#allocation7 + $0x40] sm:$0xf]
    %v456 = vld [vmem:[#allocation7 + $0x44] sm:$0xf]
    %v457 = vld [vmem:[#allocation7 + $0x48] sm:$0xf]
    %v458 = vld [vmem:[#allocation7 + $0x4c] sm:$0xf]
    %v459 = vld [vmem:[#allocation7 + $0x50] sm:$0xf]
    %v460 = vld [vmem:[#allocation7 + $0x54] sm:$0xf]
    %v461 = vld [vmem:[#allocation7 + $0x58] sm:$0xf]
    %v462 = vld [vmem:[#allocation7 + $0x5c] sm:$0xf]
    %v463 = vld [vmem:[#allocation7 + $0x60] sm:$0xf]
    %v464 = vld [vmem:[#allocation7 + $0x64] sm:$0xf]
    %v465 = vld [vmem:[#allocation7 + $0x68] sm:$0xf]
    %v466 = vld [vmem:[#allocation7 + $0x6c] sm:$0xf]
    %v467 = vld [vmem:[#allocation7 + $0x70] sm:$0xf]
    %v468 = vld [vmem:[#allocation7 + $0x74] sm:$0xf]
    %v469 = vld [vmem:[#allocation7 + $0x78] sm:$0xf]
    %v470 = vld [vmem:[#allocation7 + $0x7c] sm:$0xf]
    %v471 = vld [vmem:[#allocation7 + $0x80] sm:$0xf]
    %v472 = vld [vmem:[#allocation7 + $0x84] sm:$0xf]
    %v473 = vld [vmem:[#allocation7 + $0x88] sm:$0xf]
    %v474 = vld [vmem:[#allocation7 + $0x8c] sm:$0xf]
    %v475 = vld [vmem:[#allocation7 + $0x90] sm:$0xf]
    %v476 = vld [vmem:[#allocation7 + $0x94] sm:$0xf]
    %v477 = vld [vmem:[#allocation7 + $0x98] sm:$0xf]
    %v478 = vld [vmem:[#allocation7 + $0x9c] sm:$0xf]
    %v479 = vld [vmem:[#allocation7 + $0xa0] sm:$0xf]
    %v480 = vld [vmem:[#allocation7 + $0xa4] sm:$0xf]
    %v481 = vld [vmem:[#allocation7 + $0xa8] sm:$0xf]
    %v482 = vld [vmem:[#allocation7 + $0xac] sm:$0xf]
    %v483 = vld [vmem:[#allocation7 + $0xb0] sm:$0xf]
    %v484 = vld [vmem:[#allocation7 + $0xb4] sm:$0xf]
    %v485 = vld [vmem:[#allocation7 + $0xb8] sm:$0xf]
    %v486 = vld [vmem:[#allocation7 + $0xbc] sm:$0xf]
    %v487 = vld [vmem:[#allocation7 + $0xc0] sm:$0xf]
    %v488 = vld [vmem:[#allocation7 + $0xc4] sm:$0xf]
    %v489 = vld [vmem:[#allocation7 + $0xc8] sm:$0xf]
    %v490 = vld [vmem:[#allocation7 + $0xcc] sm:$0xf]
    %v491 = vld [vmem:[#allocation7 + $0xd0] sm:$0xf]
    %v492 = vld [vmem:[#allocation7 + $0xd4] sm:$0xf]
    %v493 = vld [vmem:[#allocation7 + $0xd8] sm:$0xf]
    %v494 = vld [vmem:[#allocation7 + $0xdc] sm:$0xf]
    %v495 = vld [vmem:[#allocation7 + $0xe0] sm:$0xf]
    %v496 = vld [vmem:[#allocation7 + $0xe4] sm:$0xf]
    %v497 = vld [vmem:[#allocation7 + $0xe8] sm:$0xf]
    %v498 = vld [vmem:[#allocation7 + $0xec] sm:$0xf]
    %v499 = vld [vmem:[#allocation7 + $0xf0] sm:$0xf]
    %v500 = vld [vmem:[#allocation7 + $0xf4] sm:$0xf]
    %v501 = vld [vmem:[#allocation7 + $0xf8] sm:$0xf]
    %v502 = vld [vmem:[#allocation7 + $0xfc] sm:$0xf]
    %v503 = vld [vmem:[%s4] sm:$0x1]
    %v505 = vlaneseq
    %v506 = vshrl.u32 %v505, 7
    %v507 = vsub.s32 0, %v506
    %v508 = vrot.slane %v503, %v507
    %v574 = vunpack.c.l.b16 %v439
    %v575 = vunpack.c.l.b16 %v440
    %v576 = vunpack.c.l.b16 %v441
    %v577 = vunpack.c.l.b16 %v442
    %v578 = vunpack.c.l.b16 %v443
    %v579 = vunpack.c.l.b16 %v444
    %v580 = vunpack.c.l.b16 %v445
    %v581 = vunpack.c.l.b16 %v446
    %v582 = vunpack.c.l.b16 %v447
    %v583 = vunpack.c.l.b16 %v448
    %v584 = vunpack.c.l.b16 %v449
    %v585 = vunpack.c.l.b16 %v450
    %v586 = vunpack.c.l.b16 %v451
    %v587 = vunpack.c.l.b16 %v452
    %v588 = vunpack.c.l.b16 %v453
    %v589 = vunpack.c.l.b16 %v454
    %v590 = vunpack.c.l.b16 %v455
    %v591 = vunpack.c.l.b16 %v456
    %v592 = vunpack.c.l.b16 %v457
    %v593 = vunpack.c.l.b16 %v458
    %v594 = vunpack.c.l.b16 %v459
    %v595 = vunpack.c.l.b16 %v460
    %v596 = vunpack.c.l.b16 %v461
    %v597 = vunpack.c.l.b16 %v462
    %v598 = vunpack.c.l.b16 %v463
    %v599 = vunpack.c.l.b16 %v464
    %v600 = vunpack.c.l.b16 %v465
    %v601 = vunpack.c.l.b16 %v466
    %v602 = vunpack.c.l.b16 %v467
    %v603 = vunpack.c.l.b16 %v468
    %v604 = vunpack.c.l.b16 %v469
    %v605 = vunpack.c.l.b16 %v470
    %v606 = vunpack.c.l.b16 %v471
    %v607 = vunpack.c.l.b16 %v472
    %v608 = vunpack.c.l.b16 %v473
    %v609 = vunpack.c.l.b16 %v474
    %v610 = vunpack.c.l.b16 %v475
    %v611 = vunpack.c.l.b16 %v476
    %v612 = vunpack.c.l.b16 %v477
    %v613 = vunpack.c.l.b16 %v478
    %v614 = vunpack.c.l.b16 %v479
    %v615 = vunpack.c.l.b16 %v480
    %v616 = vunpack.c.l.b16 %v481
    %v617 = vunpack.c.l.b16 %v482
    %v618 = vunpack.c.l.b16 %v483
    %v619 = vunpack.c.l.b16 %v484
    %v620 = vunpack.c.l.b16 %v485
    %v621 = vunpack.c.l.b16 %v486
    %v622 = vunpack.c.l.b16 %v487
    %v623 = vunpack.c.l.b16 %v488
    %v624 = vunpack.c.l.b16 %v489
    %v625 = vunpack.c.l.b16 %v490
    %v626 = vunpack.c.l.b16 %v491
    %v627 = vunpack.c.l.b16 %v492
    %v628 = vunpack.c.l.b16 %v493
    %v629 = vunpack.c.l.b16 %v494
    %v630 = vunpack.c.l.b16 %v495
    %v631 = vunpack.c.l.b16 %v496
    %v632 = vunpack.c.l.b16 %v497
    %v633 = vunpack.c.l.b16 %v498
    %v634 = vunpack.c.l.b16 %v499
    %v635 = vunpack.c.l.b16 %v500
    %v636 = vunpack.c.l.b16 %v501
    %v637 = vunpack.c.l.b16 %v502
    %v638 = vpack.c.b16 %v575, %v574
    %v639 = vpack.c.b16 %v577, %v576
    %v640 = vpack.c.b16 %v579, %v578
    %v641 = vpack.c.b16 %v581, %v580
    %v642 = vpack.c.b16 %v583, %v582
    %v643 = vpack.c.b16 %v585, %v584
    %v644 = vpack.c.b16 %v587, %v586
    %v645 = vpack.c.b16 %v589, %v588
    %v646 = vpack.c.b16 %v591, %v590
    %v647 = vpack.c.b16 %v593, %v592
    %v648 = vpack.c.b16 %v595, %v594
    %v649 = vpack.c.b16 %v597, %v596
    %v650 = vpack.c.b16 %v599, %v598
    %v651 = vpack.c.b16 %v601, %v600
    %v652 = vpack.c.b16 %v603, %v602
    %v653 = vpack.c.b16 %v605, %v604
    %v654 = vpack.c.b16 %v607, %v606
    %v655 = vpack.c.b16 %v609, %v608
    %v656 = vpack.c.b16 %v611, %v610
    %v657 = vpack.c.b16 %v613, %v612
    %v658 = vpack.c.b16 %v615, %v614
    %v659 = vpack.c.b16 %v617, %v616
    %v660 = vpack.c.b16 %v619, %v618
    %v661 = vpack.c.b16 %v621, %v620
    %v662 = vpack.c.b16 %v623, %v622
    %v663 = vpack.c.b16 %v625, %v624
    %v664 = vpack.c.b16 %v627, %v626
    %v665 = vpack.c.b16 %v629, %v628
    %v666 = vpack.c.b16 %v631, %v630
    %v667 = vpack.c.b16 %v633, %v632
    %v668 = vpack.c.b16 %v635, %v634
    %v669 = vpack.c.b16 %v637, %v636
    %702 = vmatprep.subr.bf16.mxu0 0
    %703 = vmatpush1.bf16.msra.mxu0 %v638
    %704 = vmatprep.subr.bf16.mxu0 0
    %705 = vmatpush1.bf16.msra.mxu0 %v639
    %706 = vmatprep.subr.bf16.mxu0 0
    %707 = vmatpush1.bf16.msra.mxu0 %v640
    %708 = vmatprep.subr.bf16.mxu0 0
    %709 = vmatpush1.bf16.msra.mxu0 %v641
    %710 = vmatprep.subr.bf16.mxu0 0
    %711 = vmatpush1.bf16.msra.mxu0 %v642
    %712 = vmatprep.subr.bf16.mxu0 0
    %713 = vmatpush1.bf16.msra.mxu0 %v643
    %714 = vmatprep.subr.bf16.mxu0 0
    %715 = vmatpush1.bf16.msra.mxu0 %v644
    %716 = vmatprep.subr.bf16.mxu0 0
    %717 = vmatpush1.bf16.msra.mxu0 %v645
    %718 = vmatprep.subr.bf16.mxu0 0
    %719 = vmatpush1.bf16.msra.mxu0 %v646
    %720 = vmatprep.subr.bf16.mxu0 0
    %721 = vmatpush1.bf16.msra.mxu0 %v647
    %722 = vmatprep.subr.bf16.mxu0 0
    %723 = vmatpush1.bf16.msra.mxu0 %v648
    %724 = vmatprep.subr.bf16.mxu0 0
    %725 = vmatpush1.bf16.msra.mxu0 %v649
    %726 = vmatprep.subr.bf16.mxu0 0
    %727 = vmatpush1.bf16.msra.mxu0 %v650
    %728 = vmatprep.subr.bf16.mxu0 0
    %729 = vmatpush1.bf16.msra.mxu0 %v651
    %730 = vmatprep.subr.bf16.mxu0 0
    %731 = vmatpush1.bf16.msra.mxu0 %v652
    %732 = vmatprep.subr.bf16.mxu0 0
    %733 = vmatpush1.bf16.msra.mxu0 %v653
    %734 = vmatprep.mubr.bf16.mxu0 %v436
    %735 = vmatmul.mubr.bf16.gmra.mrb[0].mxu0 %v435
    %v736 = vpop.f32.mrb[0].mxu0
    %v737 = vadd.f32 %v508, %v736
    %v738 = vpop.f32.mrb[0].mxu0
    %v739 = vpop.f32.mrb[0].mxu0
    %v740 = vadd.f32 %v508, %v739
    %v741 = vpop.f32.mrb[0].mxu0
    %742 = vdwg.mxu0
    %743 = vmatprep.subr.bf16.mxu0 0
    %744 = vmatpush1.bf16.msra.mxu0 %v654
    %745 = vmatprep.subr.bf16.mxu0 0
    %746 = vmatpush1.bf16.msra.mxu0 %v655
    %747 = vmatprep.subr.bf16.mxu0 0
    %748 = vmatpush1.bf16.msra.mxu0 %v656
    %749 = vmatprep.subr.bf16.mxu0 0
    %750 = vmatpush1.bf16.msra.mxu0 %v657
    %751 = vmatprep.subr.bf16.mxu0 0
    %752 = vmatpush1.bf16.msra.mxu0 %v658
    %753 = vmatprep.subr.bf16.mxu0 0
    %754 = vmatpush1.bf16.msra.mxu0 %v659
    %755 = vmatprep.subr.bf16.mxu0 0
    %756 = vmatpush1.bf16.msra.mxu0 %v660
    %757 = vmatprep.subr.bf16.mxu0 0
    %758 = vmatpush1.bf16.msra.mxu0 %v661
    %759 = vmatprep.subr.bf16.mxu0 0
    %760 = vmatpush1.bf16.msra.mxu0 %v662
    %761 = vmatprep.subr.bf16.mxu0 0
    %762 = vmatpush1.bf16.msra.mxu0 %v663
    %763 = vmatprep.subr.bf16.mxu0 0
    %764 = vmatpush1.bf16.msra.mxu0 %v664
    %765 = vmatprep.subr.bf16.mxu0 0
    %766 = vmatpush1.bf16.msra.mxu0 %v665
    %767 = vmatprep.subr.bf16.mxu0 0
    %768 = vmatpush1.bf16.msra.mxu0 %v666
    %769 = vmatprep.subr.bf16.mxu0 0
    %770 = vmatpush1.bf16.msra.mxu0 %v667
    %771 = vmatprep.subr.bf16.mxu0 0
    %772 = vmatpush1.bf16.msra.mxu0 %v668
    %773 = vmatprep.subr.bf16.mxu0 0
    %774 = vmatpush1.bf16.msra.mxu0 %v669
    %775 = vmatprep.mubr.bf16.mxu0 %v438
    %776 = vmatmul.mubr.bf16.gmra.mrb[0].mxu0 %v437
    %v777 = vpop.f32.mrb[0].mxu0
    %v778 = vadd.f32 %v737, %v777
    %v779 = vpop.f32.mrb[0].mxu0
    %v780 = vpop.f32.mrb[0].mxu0
    %v781 = vadd.f32 %v740, %v780
    %v782 = vpop.f32.mrb[0].mxu0
    %783 = vdwg.mxu0
    %784 = vst [vmem:[#allocation8] sm:$0xff] %v778
    %785 = vst [vmem:[#allocation8 + $0x8] sm:$0xff] %v781
    // Predicated region
    $region34: #{tpu_custom_call.1} parent=1 // pred_check
      _
    $region35: #{tpu_custom_call.1} parent=1 // pred_check_branch
      %787 = sbr.rel (0) target = $region37
    $region36: #{tpu_custom_call.1} parent=1 // pred_region
      %s789 = ssub.s32 256, 256
      %790 = vsyncadd [#allocation4], %s789
      %s791 = sshll.u32 [#allocation8], 4
      %s792 = int_to_ptr.vmem [resolvable:$true] %s791
      %797 = dma.vmem_to_hbm [thread:$0]  %s792, 256, %s5, [#allocation4], 128, 128, 8
    $region37: #{tpu_custom_call.1} parent=1 // pred_fallthru
      _
    // Predicated region
    $region38: #{tpu_custom_call.1} parent=1 // pred_check
      _
    $region39: #{tpu_custom_call.1} parent=1 // pred_check_branch
      %799 = sbr.rel (0) target = $region41
    $region40: #{tpu_custom_call.1} parent=1 // pred_region
      %800 = dma.done [#allocation4], 256
    $region41: #{tpu_custom_call.1} parent=1 // pred_fallthru
      _
    %801 = vsyncpa [#allocation3], 1
    %802 = vsyncpa [#allocation6], 1
    %803 = vsyncpa [#allocation4], 1

</llo_original>
